<compile_context>
chip_gen: v5e
topology: v5e:2x2
jax: 0.10.0
libtpu: 0.0.40
codegen_flags: <defaults>
</compile_context>

<pallas_src>
import functools

import jax
import jax.numpy as jnp
from jax.experimental import pallas as pl
from jax.experimental.pallas import tpu as pltpu


def _round_up(x, m):
    return ((x + m - 1) // m) * m


def _vmem_capacity_bytes():
    """Physical VMEM of the current chip; conservative fallback if unknown."""
    try:
        cap = int(pltpu.get_tpu_info().vmem_capacity_bytes)
        if cap > 0:
            return cap
    except Exception:
        pass
    return 64 << 20  # v7x-sized fallback: safe on every generation


def _num_tensorcores():
    """TensorCores per chip (2 on v7x, 1 on v5e/v6e); 1 if undeterminable."""
    try:
        info = pltpu.get_tpu_info()
        for name in ("num_cores", "tensorcore_count", "num_tensorcores",
                     "cores_per_chip"):
            n = getattr(info, name, None)
            if n:
                return int(n)
    except Exception:
        pass
    try:
        return int(getattr(jax.devices()[0], "num_cores", 1) or 1)
    except Exception:
        return 1


def _make_dice_kernel(L, tl, k_inner, need_mask):
    def kernel(x_ref, t_ref, inter_ref, union_ref):
        # Grid: (row_blocks, n_chunks, k_inner); k (last axis) is the reduction.
        k = pl.program_id(2)

        # Output blocks are resident across the k axis; init once per (i, c).
        @pl.when(k == 0)
        def _():
            inter_ref[...] = jnp.zeros_like(inter_ref)
            union_ref[...] = jnp.zeros_like(union_ref)

        x = x_ref[...].astype(jnp.float32)
        p = 0.5 * jnp.tanh(0.5 * x) + 0.5          # sigmoid via one EUP tanh
        t = t_ref[...].astype(jnp.float32)

        def accumulate(pp, tt):
            # Per-step tile reduction straight into the tiny resident output:
            # VPU adds across lane-vreg columns + one XLU lane-reduce per 8 rows.
            inter_ref[...] += jnp.sum(pp * tt, axis=1, keepdims=True)[None]
            union_ref[...] += jnp.sum(pp + tt, axis=1, keepdims=True)[None]

        if need_mask:
            # Ragged (or duplicated, when the 2-chunk split clamps the block
            # index) coverage exists somewhere — but only edge blocks pay for it.
            c = pl.program_id(1)
            start = (c * k_inner + k) * tl          # un-clamped column offset
            is_edge = start + tl > L

            @pl.when(jnp.logical_not(is_edge))
            def _():
                accumulate(p, t)

            @pl.when(is_edge)
            def _():
                cols = start + jax.lax.broadcasted_iota(jnp.int32, p.shape, 1)
                valid = cols < L
                accumulate(jnp.where(valid, p, 0.0), jnp.where(valid, t, 0.0))
        else:
            accumulate(p, t)

    return kernel


def _dice_sums(x2d, t2d):
    """Returns per-row (intersection, union) sums for a (R, L) problem."""
    R, L = x2d.shape
    isx = jnp.dtype(x2d.dtype).itemsize
    ist = jnp.dtype(t2d.dtype).itemsize

    # --- row (sublane) tile: dtype-aware rounding (8 / 16 / 32) ---------------
    sub = 8 * max(max(1, 4 // isx), max(1, 4 // ist))
    if R < sub:
        tr = R                                     # block == full sublane extent
    else:
        tr = min(_round_up(R, sub), 256)

    # --- column (lane) tile: VMEM-budget driven, code-size capped -------------
    LANE = 128
    vmem_usable = (_vmem_capacity_bytes() * 7) // 8   # headroom below physical
    if L < LANE:
        tl = L                                     # block == full lane extent
    else:
        per_elem = 2 * (isx + ist)                 # 2 pipeline buffers per input
        budget = max(vmem_usable - (4 << 20), 8 << 20)
        max_elems = min(budget // per_elem, 1 << 20)   # <= ~4 MiB f32 per tile
        max_tl = max(LANE, (max_elems // tr) // LANE * LANE)
        tl = min(_round_up(L, LANE), max_tl)

    row_blocks = pl.cdiv(R, tr)
    k_total = pl.cdiv(L, tl)

    # --- megacore split: only on multi-TC chips, only when it helps -----------
    n_chunks = 2 if (_num_tensorcores() >= 2 and k_total >= 2
                     and row_blocks % 2 == 1) else 1
    k_inner = pl.cdiv(k_total, n_chunks)

    clamp_needed = n_chunks * k_inner > k_total    # odd split duplicates a block
    need_mask = (n_chunks * k_inner * tl) != L     # ragged / duplicated coverage

    def in_map(i, c, k):
        b = c * k_inner + k
        if clamp_needed:
            b = jnp.minimum(b, k_total - 1)        # keep DMA in-bounds; masked out
        return (i, b)

    in_spec = pl.BlockSpec((tr, tl), in_map)
    out_spec = pl.BlockSpec((1, tr, 1), lambda i, c, k: (c, i, 0))

    Rp = row_blocks * tr
    out_shape = jax.ShapeDtypeStruct((n_chunks, Rp, 1), jnp.float32)

    # VMEM: 2 inputs x 2 pipeline buffers x tile (+ tiny outputs / margin).
    need = 2 * tr * tl * (isx + ist)
    vmem_limit = int(min(vmem_usable, max(32 << 20, need + (4 << 20))))

    kernel = _make_dice_kernel(L, tl, k_inner, need_mask)

    inter, union = pl.pallas_call(
        kernel,
        out_shape=(out_shape, out_shape),
        grid_spec=pltpu.PrefetchScalarGridSpec(
            num_scalar_prefetch=0,
            grid=(row_blocks, n_chunks, k_inner),
            in_specs=[in_spec, in_spec],
            out_specs=[out_spec, out_spec],
        ),
        compiler_params=pltpu.CompilerParams(
            dimension_semantics=("parallel", "parallel", "arbitrary"),
            vmem_limit_bytes=vmem_limit,
        ),
    )(x2d, t2d)

    # Rows >= R of the last row block are garbage (per-row only) — discard here.
    inter = inter.sum(axis=0)[:R, 0]
    union = union.sum(axis=0)[:R, 0]
    return inter, union


@functools.partial(jax.jit, static_argnames=("smooth",))
def dice_loss(inputs, targets, smooth=1e-6):
    """Pallas implementation of DiceLoss.forward (inputs/targets: NCHW).

    Inputs and targets are consumed in their native dtypes (pass targets as
    int8/bool/bf16 to cut the HBM read stream); casting to f32 happens on-chip.
    """
    N, C, H, W = inputs.shape
    R, L = N * C, H * W

    # Pure metadata reshape — no pre-cast, no padding.
    x2d = inputs.reshape(R, L)
    t2d = targets.reshape(R, L)

    inter, union = _dice_sums(x2d, t2d)

    dice = (2.0 * inter + smooth) / (union + smooth)
    return 1.0 - jnp.mean(dice)


def _reference_dice_loss(inputs, targets, smooth=1e-6):
    p = jax.nn.sigmoid(inputs.astype(jnp.float32))
    t = targets.astype(jnp.float32)
    intersection = (p * t).sum(axis=(2, 3))
    union = p.sum(axis=(2, 3)) + t.sum(axis=(2, 3))
    dice = (2.0 * intersection + smooth) / (union + smooth)
    return 1.0 - dice.mean()


if __name__ == "__main__":
    key = jax.random.PRNGKey(0)
    k1, k2 = jax.random.split(key)

    N, C, H, W = 2, 4, 16, 16
    inputs = jax.random.normal(k1, (N, C, H, W), dtype=jnp.float32)
    # Binary targets kept in a narrow native dtype (int8): the kernel casts
    # to f32 on-chip, so the t HBM stream is 4x smaller than f32.
    targets = (jax.random.uniform(k2, (N, C, H, W)) > 0.5).astype(jnp.int8)

    loss = dice_loss(inputs, targets)
    jax.block_until_ready(loss)

    ref = _reference_dice_loss(inputs, targets)
    assert jnp.allclose(loss, ref, atol=1e-5, rtol=1e-5), (loss, ref)

    print("KERNEL_OK")
</pallas_src>

<mosaic_0001>
module attributes {stable_mosaic.version = 11 : i64} {
  func.func @kernel(%arg0: i32, %arg1: i32, %arg2: i32, %arg3: memref<8x256xf32, #tpu.memory_space<vmem>>, %arg4: memref<8x256xi8, #tpu.memory_space<vmem>>, %arg5: memref<1x8x1xf32, #tpu.memory_space<vmem>>, %arg6: memref<1x8x1xf32, #tpu.memory_space<vmem>>) attributes {dimension_semantics = [#tpu.dimension_semantics<parallel>, #tpu.dimension_semantics<parallel>, #tpu.dimension_semantics<arbitrary>], iteration_bounds = array<i64: 1, 1, 1>, scalar_prefetch = 0 : i64, scratch_operands = 0 : i64, tpu.core_type = #tpu.core_type<tc>, window_params = [{transform_indices = @transform_0, window_bounds = array<i64: 8, 256>}, {transform_indices = @transform_1, window_bounds = array<i64: 8, 256>}, {transform_indices = @transform_2, window_bounds = array<i64: 1, 8, 1>}, {transform_indices = @transform_3, window_bounds = array<i64: 1, 8, 1>}]} {
    %c0_i32 = arith.constant 0 : i32
    %0 = arith.cmpi eq, %arg2, %c0_i32 : i32
    %1 = arith.extui %0 : i1 to i32
    %c0_i32_0 = arith.constant 0 : i32
    %2 = arith.cmpi ne, %1, %c0_i32_0 : i32
    scf.if %2 {
      %cst_20 = arith.constant 0.000000e+00 : f32
      %27 = vector.broadcast %cst_20 : f32 to vector<1x8x1xf32>
      %c0_21 = arith.constant 0 : index
      %c0_22 = arith.constant 0 : index
      %c0_23 = arith.constant 0 : index
      %28 = vector.load %arg5[%c0_21, %c0_22, %c0_23] : memref<1x8x1xf32, #tpu.memory_space<vmem>>, vector<1x8x1xf32>
      tpu.vector_store %arg5[%c0_21, %c0_22, %c0_23], %27 {strides = array<i32>} : memref<1x8x1xf32, #tpu.memory_space<vmem>>, vector<1x8x1xf32>,
      %cst_24 = arith.constant 0.000000e+00 : f32
      %29 = vector.broadcast %cst_24 : f32 to vector<1x8x1xf32>
      %c0_25 = arith.constant 0 : index
      %c0_26 = arith.constant 0 : index
      %c0_27 = arith.constant 0 : index
      %30 = vector.load %arg6[%c0_25, %c0_26, %c0_27] : memref<1x8x1xf32, #tpu.memory_space<vmem>>, vector<1x8x1xf32>
      tpu.vector_store %arg6[%c0_25, %c0_26, %c0_27], %29 {strides = array<i32>} : memref<1x8x1xf32, #tpu.memory_space<vmem>>, vector<1x8x1xf32>,
    } else {
    }
    %c0 = arith.constant 0 : index
    %c0_1 = arith.constant 0 : index
    %3 = vector.load %arg3[%c0, %c0_1] : memref<8x256xf32, #tpu.memory_space<vmem>>, vector<8x256xf32>
    %cst = arith.constant 5.000000e-01 : f32
    %4 = vector.broadcast %cst : f32 to vector<8x256xf32>
    %5 = arith.mulf %4, %3 : vector<8x256xf32>
    %6 = math.tanh %5 : vector<8x256xf32>
    %cst_2 = arith.constant 5.000000e-01 : f32
    %7 = vector.broadcast %cst_2 : f32 to vector<8x256xf32>
    %8 = arith.mulf %7, %6 : vector<8x256xf32>
    %cst_3 = arith.constant 5.000000e-01 : f32
    %9 = vector.broadcast %cst_3 : f32 to vector<8x256xf32>
    %10 = arith.addf %8, %9 : vector<8x256xf32>
    %c0_4 = arith.constant 0 : index
    %c0_5 = arith.constant 0 : index
    %11 = vector.load %arg4[%c0_4, %c0_5] : memref<8x256xi8, #tpu.memory_space<vmem>>, vector<8x256xi8>
    %12 = arith.sitofp %11 : vector<8x256xi8> to vector<8x256xf32>
    %c0_6 = arith.constant 0 : index
    %c0_7 = arith.constant 0 : index
    %c0_8 = arith.constant 0 : index
    %13 = vector.load %arg5[%c0_6, %c0_7, %c0_8] : memref<1x8x1xf32, #tpu.memory_space<vmem>>, vector<1x8x1xf32>
    %14 = arith.mulf %10, %12 : vector<8x256xf32>
    %cst_9 = arith.constant dense<0.000000e+00> : vector<8xf32>
    %15 = vector.multi_reduction <add>, %14, %cst_9 [1] : vector<8x256xf32> to vector<8xf32>
    %16 = vector.shape_cast %15 : vector<8xf32> to vector<8x1xf32>
    %17 = vector.shape_cast %16 : vector<8x1xf32> to vector<1x8x1xf32>
    %18 = arith.addf %13, %17 : vector<1x8x1xf32>
    %c0_10 = arith.constant 0 : index
    %c0_11 = arith.constant 0 : index
    %c0_12 = arith.constant 0 : index
    %19 = vector.load %arg5[%c0_10, %c0_11, %c0_12] : memref<1x8x1xf32, #tpu.memory_space<vmem>>, vector<1x8x1xf32>
    tpu.vector_store %arg5[%c0_10, %c0_11, %c0_12], %18 {strides = array<i32>} : memref<1x8x1xf32, #tpu.memory_space<vmem>>, vector<1x8x1xf32>,
    %c0_13 = arith.constant 0 : index
    %c0_14 = arith.constant 0 : index
    %c0_15 = arith.constant 0 : index
    %20 = vector.load %arg6[%c0_13, %c0_14, %c0_15] : memref<1x8x1xf32, #tpu.memory_space<vmem>>, vector<1x8x1xf32>
    %21 = arith.addf %10, %12 : vector<8x256xf32>
    %cst_16 = arith.constant dense<0.000000e+00> : vector<8xf32>
    %22 = vector.multi_reduction <add>, %21, %cst_16 [1] : vector<8x256xf32> to vector<8xf32>
    %23 = vector.shape_cast %22 : vector<8xf32> to vector<8x1xf32>
    %24 = vector.shape_cast %23 : vector<8x1xf32> to vector<1x8x1xf32>
    %25 = arith.addf %20, %24 : vector<1x8x1xf32>
    %c0_17 = arith.constant 0 : index
    %c0_18 = arith.constant 0 : index
    %c0_19 = arith.constant 0 : index
    %26 = vector.load %arg6[%c0_17, %c0_18, %c0_19] : memref<1x8x1xf32, #tpu.memory_space<vmem>>, vector<1x8x1xf32>
    tpu.vector_store %arg6[%c0_17, %c0_18, %c0_19], %25 {strides = array<i32>} : memref<1x8x1xf32, #tpu.memory_space<vmem>>, vector<1x8x1xf32>,
    return
  }
  func.func @transform_0(%arg0: i32, %arg1: i32, %arg2: i32) -> (i32, i32) {
    %c1_i32 = arith.constant 1 : i32
    %0 = arith.muli %arg1, %c1_i32 : i32
    %1 = arith.addi %0, %arg2 : i32
    %c0_i32 = arith.constant 0 : i32
    return %arg0, %1 : i32, i32
  }
  func.func @transform_1(%arg0: i32, %arg1: i32, %arg2: i32) -> (i32, i32) {
    %c1_i32 = arith.constant 1 : i32
    %0 = arith.muli %arg1, %c1_i32 : i32
    %1 = arith.addi %0, %arg2 : i32
    %c0_i32 = arith.constant 0 : i32
    return %arg0, %1 : i32, i32
  }
  func.func @transform_2(%arg0: i32, %arg1: i32, %arg2: i32) -> (i32, i32, i32) {
    %c0_i32 = arith.constant 0 : i32
    %c0_i32_0 = arith.constant 0 : i32
    return %arg1, %arg0, %c0_i32 : i32, i32, i32
  }
  func.func @transform_3(%arg0: i32, %arg1: i32, %arg2: i32) -> (i32, i32, i32) {
    %c0_i32 = arith.constant 0 : i32
    %c0_i32_0 = arith.constant 0 : i32
    return %arg1, %arg0, %c0_i32 : i32, i32, i32
  }
}

</mosaic_0001>

<llo_original>
// kernel: dice_loss.1
$region0: #{dice_loss.1}
  #allocation0 [shape = 'u32[]', space=smem, size = 0x4, offset = 0x4, fixed_abs, tag = 'smem constant byte address 0x4 - core index']
  #allocation1 [shape = 'u32[72,128]{1,0:T(1,128)}', space=vmem, size = 0x9000, scoped, tag = 'internal scratch']
  %s0 = inlined_call_operand.vmem [shape: f32[8,256], index: 0, kind: input, shape index: {}]
  %s1 = inlined_call_operand.vmem [shape: s8[8,256], index: 1, kind: input, shape index: {}]
  %s2 = inlined_call_operand.vmem [shape: f32[1,8,1], index: 2, kind: output, shape index: {0}]
  %s3 = inlined_call_operand.vmem [shape: f32[1,8,1], index: 3, kind: output, shape index: {1}]
  %4 = xla_tuple %s2, %s3
  %s5 = sld [smem:[#allocation0]]
  $region30: #{dice_loss.1} parent=0
    _
  %s7 = ssub.s32 1, %s5
  %s8 = scalar_select 0, %s7, %s5
  // Predicated region
  $region2: #{dice_loss.1} parent=0 // pred_check
    _
  $region3: #{dice_loss.1} parent=0 // pred_check_branch
    %10 = sbr.rel (0) target = $region5
  $region4: #{dice_loss.1} parent=0 // pred_region
    %s11 = sadd.s32 0, 0
    %s12 = smul.u32 2, %s11
    %p13 = scmp.lt.s32.totalorder %s12, 1
    %s14 = scalar_select %p13, %s12, 1
    %s15 = smul.addr %s14, 8
    %s16 = scalar_lea.vmem %s0, %s15
    %s17 = sadd.s32 0, 0
    %s18 = smul.u32 2, %s17
  $region5: #{dice_loss.1} parent=0 // pred_fallthru
    _
  // Predicated region
  $region6: #{dice_loss.1} parent=0 // pred_check
    _
  $region7: #{dice_loss.1} parent=0 // pred_check_branch
    %20 = sbr.rel (0) target = $region9
  $region8: #{dice_loss.1} parent=0 // pred_region
    %s21 = sadd.s32 0, 0
    %s22 = smul.u32 2, %s21
    %p23 = scmp.lt.s32.totalorder %s22, 1
    %s24 = scalar_select %p23, %s22, 1
    %s25 = smul.addr %s24, 2
    %s26 = scalar_lea.vmem %s1, %s25
    %s27 = sadd.s32 0, 0
    %s28 = smul.u32 2, %s27
  $region9: #{dice_loss.1} parent=0 // pred_fallthru
    _
  %s29 = sadd.s32 0, 0
  %s30 = smul.u32 2, %s29
  %p31 = scmp.lt.s32.totalorder %s30, 1
  %s32 = scalar_select %p31, %s30, 1
  %s33 = smul.addr %s32, 8
  %s34 = scalar_lea.vmem %s0, %s33
  %s35 = sadd.s32 0, 0
  %s36 = smul.u32 2, %s35
  %p37 = scmp.lt.s32.totalorder %s36, 1
  %s38 = scalar_select %p37, %s36, 1
  %s39 = smul.addr %s38, 2
  %s40 = scalar_lea.vmem %s1, %s39
  %s41 = sadd.s32 0, 0
  %s42 = smul.u32 2, %s41
  %p43 = scmp.lt.s32.totalorder %s42, 1
  %s44 = scalar_select %p43, %s42, 1
  %s45 = smul.addr %s44, 8
  %s46 = scalar_lea.vmem %s0, %s45
  %s47 = sadd.s32 0, 0
  %s48 = smul.u32 2, %s47
  %s49 = sadd.s32 0, 0
  %s50 = smul.u32 2, %s49
  %p51 = scmp.lt.s32.totalorder %s50, 1
  %s52 = scalar_select %p51, %s50, 1
  %s53 = smul.addr %s52, 2
  %s54 = scalar_lea.vmem %s1, %s53
  %s55 = sadd.s32 0, 0
  %s56 = smul.u32 2, %s55
  %p57 = scmp.eq.s32.totalorder 0, 0
  // Predicated region
  $region10: #{dice_loss.1} parent=0 // pred_check
    %p58 = pneg %p57
  $region11: #{dice_loss.1} parent=0 // pred_check_branch
    %60 = sbr.rel (%p58) target = $region13
  $region12: #{dice_loss.1} parent=0 // pred_region
    %vm61 = vcmask 7168
    %62 = vst.msk [vmem:[%s2] sm:$0xff] %vm61, 0.0
    %63 = vst.msk [vmem:[%s3] sm:$0xff] %vm61, 0.0
  $region13: #{dice_loss.1} parent=0 // pred_fallthru
    _
  %v64 = vld [vmem:[%s46] sm:$0xff]
  %v65 = vld [vmem:[%s46 + $0x8] sm:$0xff]
  %v66 = vmul.f32 %v64, 0.5
  %v67 = vmul.f32 %v65, 0.5
  %v68 = vtanh.pop %v66
  %v69 = vtanh.pop %v67
  %v70 = vmul.f32 %v68, 0.5
  %v71 = vmul.f32 %v69, 0.5
  %v72 = vadd.f32 %v70, 0.5
  %v73 = vadd.f32 %v71, 0.5
  %v74 = vld [vmem:[%s54] sm:$0xf]
  %v75 = vunpack.c.0.s8 %v74
  %v76 = vunpack.c.1.s8 %v74
  %v77 = vcvt.s32.f32 %v75
  %v78 = vcvt.s32.f32 %v76
  %v79 = vld [vmem:[%s2] sm:$0xff]
  %v80 = vmul.f32 %v72, %v77
  %v81 = vmul.f32 %v73, %v78
  %v82 = vadd.f32 %v80, %v81
  %83 = vadd.xlane.f32.xlu0 %v82
  %v84 = vpop.xlane.xlu0 %83
  %v85 = vadd.f32 %v79, %v84
  %vm86 = vcmask 7168
  %87 = vst.msk [vmem:[%s2] sm:$0xff] %vm86, %v85
  %v88 = vld [vmem:[%s3] sm:$0xff]
  %v89 = vadd.f32 %v72, %v77
  %v90 = vadd.f32 %v73, %v78
  %v91 = vadd.f32 %v89, %v90
  %92 = vadd.xlane.f32.xlu0 %v91
  %v93 = vpop.xlane.xlu0 %92
  %v94 = vadd.f32 %v88, %v93
  %95 = vst.msk [vmem:[%s3] sm:$0xff] %vm86, %v94
  // Predicated region
  $region14: #{dice_loss.1} parent=0 // pred_check
    _
  $region15: #{dice_loss.1} parent=0 // pred_check_branch
    %97 = sbr.rel (0) target = $region17
  $region16: #{dice_loss.1} parent=0 // pred_region
    _
  $region17: #{dice_loss.1} parent=0 // pred_fallthru
    _
  // Predicated region
  $region18: #{dice_loss.1} parent=0 // pred_check
    _
  $region19: #{dice_loss.1} parent=0 // pred_check_branch
    %99 = sbr.rel (0) target = $region21
  $region20: #{dice_loss.1} parent=0 // pred_region
    _
  $region21: #{dice_loss.1} parent=0 // pred_fallthru
    _
  // Predicated region
  $region22: #{dice_loss.1} parent=0 // pred_check
    _
  $region23: #{dice_loss.1} parent=0 // pred_check_branch
    %101 = sbr.rel (0) target = $region25
  $region24: #{dice_loss.1} parent=0 // pred_region
    _
  $region25: #{dice_loss.1} parent=0 // pred_fallthru
    _
  // Predicated region
  $region26: #{dice_loss.1} parent=0 // pred_check
    _
  $region27: #{dice_loss.1} parent=0 // pred_check_branch
    %103 = sbr.rel (0) target = $region29
  $region28: #{dice_loss.1} parent=0 // pred_region
    _
  $region29: #{dice_loss.1} parent=0 // pred_fallthru
    _

</llo_original>
